<compile_context>
chip_gen: v7x
topology: tpu7x:2x2x1
jax: 0.10.0
libtpu: 0.0.40
codegen_flags: <defaults>
</compile_context>

<pallas_src>
import functools

import jax
import jax.numpy as jnp
from jax.experimental import pallas as pl
from jax.experimental.pallas import tpu as pltpu


def _channel_gate_kernel(x_ref, w1_ref, b1_ref, w2_ref, b2_ref, o_ref, acc_ref,
                         *, hw_total: int, inv_hw: float):
    """Grid = (N, HW_tiles). x block: (1, C, hw_tile); output block: (1, 1, C)."""
    h = pl.program_id(1)

    @pl.when(h == 0)
    def _init():
        acc_ref[...] = jnp.zeros_like(acc_ref)

    x = x_ref[0].astype(jnp.float32)                          # (C, hw_tile)
    c, hw_tile = x.shape

    # Mask the (possibly partial) last spatial tile: OOB block reads are NOT
    # zero-filled, so garbage lanes must be zeroed before the reduction.
    lane = jax.lax.broadcasted_iota(jnp.int32, (c, hw_tile), dimension=1)
    rem = hw_total - h * hw_tile
    x = jnp.where(lane < rem, x, 0.0)

    # Lane-dense accumulation: (C, hw_tile) -> (C,) -> (1, C) f32 row.
    acc_ref[...] += jnp.sum(x, axis=-1)[None, :]

    # Fused 1x1-conv MLP epilogue on the final spatial tile of this batch element.
    @pl.when(h == pl.num_programs(1) - 1)
    def _epilogue():
        pooled = acc_ref[...] * inv_hw                        # (1, C)
        w1t = w1_ref[...].astype(jnp.float32)                 # (C, Cr)
        b1 = b1_ref[...].astype(jnp.float32)                  # (1, Cr)
        w2t = w2_ref[...].astype(jnp.float32)                 # (Cr, C)
        b2 = b2_ref[...].astype(jnp.float32)                  # (1, C)

        hidden = jnp.dot(pooled, w1t, preferred_element_type=jnp.float32) + b1
        hidden = jnp.maximum(hidden, 0.0)                     # (1, Cr) ReLU
        z = jnp.dot(hidden, w2t, preferred_element_type=jnp.float32) + b2
        gate = 1.0 / (1.0 + jnp.exp(-z))                      # (1, C) true sigmoid
        o_ref[...] = gate[None].astype(o_ref.dtype)           # (1, 1, C)


def _pick_hw_tile(hw: int, c: int, itemsize: int, max_tile_bytes: int) -> int:
    """Multiple-of-128 spatial tile whose (C, hw_tile) block is <= max_tile_bytes."""
    hw_padded = pl.cdiv(hw, 128) * 128
    max_elems = (max_tile_bytes // max(1, c * itemsize)) // 128 * 128
    return int(min(hw_padded, max(128, max_elems)))


def channel_gate(x, w1, b1, w2, b2, *, max_tile_bytes=8 << 20):
    """x: (N, C, H, W); w1: (C//16, C); b1: (C//16,); w2: (C, C//16); b2: (C,)."""
    N, C, H, W = x.shape
    HW = H * W
    Cr = w1.shape[0]

    x3 = x.reshape(N, C, HW)          # contiguous reshape: no extra HBM pass
    # Row-layout (lane-dense) MLP operands: (1,C)@(C,Cr) then (1,Cr)@(Cr,C).
    w1t = jnp.transpose(w1)           # (C, Cr)
    b1r = b1.reshape(1, Cr)
    w2t = jnp.transpose(w2)           # (Cr, C)
    b2r = b2.reshape(1, C)

    hw_tile = _pick_hw_tile(HW, C, x.dtype.itemsize, max_tile_bytes)
    n_hw = int(pl.cdiv(HW, hw_tile))

    # VMEM budget: double-buffered x tile + once-fetched weights + scratch/output
    # (tiny) + slack; capped under v7x's 64 MiB physical VMEM.
    tile_bytes = C * hw_tile * x.dtype.itemsize
    weight_bytes = sum(int(a.size) * a.dtype.itemsize for a in (w1t, b1r, w2t, b2r))
    vmem_limit = int(min(64 << 20, max(32 << 20, 2 * tile_bytes + weight_bytes + (8 << 20))))

    kernel = functools.partial(_channel_gate_kernel, hw_total=HW, inv_hw=1.0 / float(HW))

    cost = pl.CostEstimate(
        flops=2 * N * C * HW + 4 * N * C * Cr,
        transcendentals=N * C,
        bytes_accessed=(x.size + w1.size + b1.size + w2.size + b2.size + N * C)
        * x.dtype.itemsize,
    )

    out = pl.pallas_call(
        kernel,
        out_shape=jax.ShapeDtypeStruct((N, 1, C), x.dtype),
        grid=(N, n_hw),
        in_specs=[
            pl.BlockSpec((1, C, hw_tile), lambda n, h: (n, 0, h)),
            # Weights/biases: untiled full-array VMEM operands (fetched once, no
            # per-spec double-buffer reservation; constant across the whole grid).
            pl.BlockSpec(memory_space=pltpu.MemorySpace.VMEM),
            pl.BlockSpec(memory_space=pltpu.MemorySpace.VMEM),
            pl.BlockSpec(memory_space=pltpu.MemorySpace.VMEM),
            pl.BlockSpec(memory_space=pltpu.MemorySpace.VMEM),
        ],
        out_specs=pl.BlockSpec((1, 1, C), lambda n, h: (n, 0, 0)),
        scratch_shapes=[pltpu.VMEM((1, C), jnp.float32)],
        compiler_params=pltpu.CompilerParams(
            dimension_semantics=("parallel", "arbitrary"),
            vmem_limit_bytes=vmem_limit,
        ),
        cost_estimate=cost,
    )(x3, w1t, b1r, w2t, b2r)

    return out.reshape(N, C, 1, 1)


def channel_gate_ref(x, w1, b1, w2, b2):
    pooled = jnp.mean(x.astype(jnp.float32), axis=(2, 3))               # (N, C)
    hidden = jnp.maximum(pooled @ w1.astype(jnp.float32).T + b1, 0.0)   # (N, Cr)
    gate = jax.nn.sigmoid(hidden @ w2.astype(jnp.float32).T + b2)       # (N, C)
    return gate[:, :, None, None].astype(x.dtype)


if __name__ == "__main__":
    key = jax.random.PRNGKey(0)
    kx, k1, k2, k3, k4 = jax.random.split(key, 5)

    # out_channels must be >= 16 for the //16 reduction; use C=64 -> Cr=4.
    N, C = 2, 64
    Cr = C // 16

    w1 = jax.random.normal(k1, (Cr, C), dtype=jnp.float32) * 0.1   # conv1 weight (1x1)
    b1 = jax.random.normal(k2, (Cr,), dtype=jnp.float32) * 0.1
    w2 = jax.random.normal(k3, (C, Cr), dtype=jnp.float32) * 0.1   # conv2 weight (1x1)
    b2 = jax.random.normal(k4, (C,), dtype=jnp.float32) * 0.1

    # Case 1: 128-divisible spatial size (16x16) -> single spatial tile.
    x = jax.random.normal(kx, (N, C, 16, 16), dtype=jnp.float32)
    out = jax.block_until_ready(channel_gate(x, w1, b1, w2, b2))
    ref = channel_gate_ref(x, w1, b1, w2, b2)
    assert out.shape == (N, C, 1, 1) and out.dtype == x.dtype
    assert jnp.allclose(out, ref, atol=3e-5, rtol=1e-5), "mismatch vs reference (case 1)"

    # Case 2: realistic non-128-divisible FPN size (25x25) with a tiny tile budget to
    # force multiple spatial tiles plus a masked partial tail tile.
    x2 = jax.random.normal(kx, (N, C, 25, 25), dtype=jnp.float32)
    out2 = jax.block_until_ready(
        channel_gate(x2, w1, b1, w2, b2, max_tile_bytes=C * 128 * 4))
    ref2 = channel_gate_ref(x2, w1, b1, w2, b2)
    assert out2.shape == (N, C, 1, 1) and out2.dtype == x2.dtype
    assert jnp.allclose(out2, ref2, atol=3e-5, rtol=1e-5), "mismatch vs reference (case 2)"

    print("KERNEL_OK")
</pallas_src>

<mosaic_0001>
module attributes {stable_mosaic.version = 11 : i64} {
  func.func @_channel_gate_kernel(%arg0: i32, %arg1: i32, %arg2: memref<1x64x256xf32, #tpu.memory_space<vmem>>, %arg3: memref<64x4xf32, #tpu.memory_space<vmem>>, %arg4: memref<1x4xf32, #tpu.memory_space<vmem>>, %arg5: memref<4x64xf32, #tpu.memory_space<vmem>>, %arg6: memref<1x64xf32, #tpu.memory_space<vmem>>, %arg7: memref<1x1x64xf32, #tpu.memory_space<vmem>>, %arg8: memref<1x64xf32, #tpu.memory_space<vmem>>) attributes {dimension_semantics = [#tpu.dimension_semantics<parallel>, #tpu.dimension_semantics<arbitrary>], iteration_bounds = array<i64: 2, 1>, scalar_prefetch = 0 : i64, scratch_operands = 1 : i64, tpu.core_type = #tpu.core_type<tc>, window_params = [{transform_indices = @transform_0, window_bounds = array<i64: 1, 64, 256>}, {pipeline_mode = #tpu.pipeline_mode<synchronous>, transform_indices = @transform_1, window_bounds = array<i64: 64, 4>}, {pipeline_mode = #tpu.pipeline_mode<synchronous>, transform_indices = @transform_2, window_bounds = array<i64: 1, 4>}, {pipeline_mode = #tpu.pipeline_mode<synchronous>, transform_indices = @transform_3, window_bounds = array<i64: 4, 64>}, {pipeline_mode = #tpu.pipeline_mode<synchronous>, transform_indices = @transform_4, window_bounds = array<i64: 1, 64>}, {transform_indices = @transform_5, window_bounds = array<i64: 1, 1, 64>}]} {
    %c0_i32 = arith.constant 0 : i32
    %0 = arith.cmpi eq, %arg1, %c0_i32 : i32
    %1 = arith.extui %0 : i1 to i32
    %c0_i32_0 = arith.constant 0 : i32
    %2 = arith.cmpi ne, %1, %c0_i32_0 : i32
    scf.if %2 {
      %cst_11 = arith.constant 0.000000e+00 : f32
      %20 = vector.broadcast %cst_11 : f32 to vector<1x64xf32>
      %c0_12 = arith.constant 0 : index
      %c0_13 = arith.constant 0 : index
      %21 = vector.load %arg8[%c0_12, %c0_13] : memref<1x64xf32, #tpu.memory_space<vmem>>, vector<1x64xf32>
      tpu.vector_store %arg8[%c0_12, %c0_13], %20 {strides = array<i32>} : memref<1x64xf32, #tpu.memory_space<vmem>>, vector<1x64xf32>,
    } else {
    }
    %c0 = arith.constant 0 : index
    %c0_1 = arith.constant 0 : index
    %c0_2 = arith.constant 0 : index
    %3 = vector.load %arg2[%c0, %c0_1, %c0_2] : memref<1x64x256xf32, #tpu.memory_space<vmem>>, vector<1x64x256xf32>
    %4 = vector.shape_cast %3 : vector<1x64x256xf32> to vector<64x256xf32>
    %5 = tpu.iota {dimensions = array<i32: 1>} : vector<64x256xi32>
    %c256_i32 = arith.constant 256 : i32
    %6 = arith.muli %arg1, %c256_i32 : i32
    %c256_i32_3 = arith.constant 256 : i32
    %7 = arith.subi %c256_i32_3, %6 : i32
    %8 = vector.broadcast %7 : i32 to vector<64x256xi32>
    %9 = arith.cmpi slt, %5, %8 : vector<64x256xi32>
    %cst = arith.constant 0.000000e+00 : f32
    %10 = vector.broadcast %cst : f32 to vector<64x256xf32>
    %11 = arith.select %9, %4, %10 : vector<64x256xi1>, vector<64x256xf32>
    %c0_4 = arith.constant 0 : index
    %c0_5 = arith.constant 0 : index
    %12 = vector.load %arg8[%c0_4, %c0_5] : memref<1x64xf32, #tpu.memory_space<vmem>>, vector<1x64xf32>
    %cst_6 = arith.constant dense<0.000000e+00> : vector<64xf32>
    %13 = vector.multi_reduction <add>, %11, %cst_6 [1] : vector<64x256xf32> to vector<64xf32>
    %14 = vector.shape_cast %13 : vector<64xf32> to vector<1x64xf32>
    %15 = arith.addf %12, %14 : vector<1x64xf32>
    %c0_7 = arith.constant 0 : index
    %c0_8 = arith.constant 0 : index
    %16 = vector.load %arg8[%c0_7, %c0_8] : memref<1x64xf32, #tpu.memory_space<vmem>>, vector<1x64xf32>
    tpu.vector_store %arg8[%c0_7, %c0_8], %15 {strides = array<i32>} : memref<1x64xf32, #tpu.memory_space<vmem>>, vector<1x64xf32>,
    %c0_i32_9 = arith.constant 0 : i32
    %17 = arith.cmpi eq, %arg1, %c0_i32_9 : i32
    %18 = arith.extui %17 : i1 to i32
    %c0_i32_10 = arith.constant 0 : i32
    %19 = arith.cmpi ne, %18, %c0_i32_10 : i32
    scf.if %19 {
      %c0_11 = arith.constant 0 : index
      %c0_12 = arith.constant 0 : index
      %20 = vector.load %arg8[%c0_11, %c0_12] : memref<1x64xf32, #tpu.memory_space<vmem>>, vector<1x64xf32>
      %cst_13 = arith.constant 3.906250e-03 : f32
      %21 = vector.broadcast %cst_13 : f32 to vector<1x64xf32>
      %22 = arith.mulf %20, %21 : vector<1x64xf32>
      %c0_14 = arith.constant 0 : index
      %c0_15 = arith.constant 0 : index
      %23 = vector.load %arg3[%c0_14, %c0_15] : memref<64x4xf32, #tpu.memory_space<vmem>>, vector<64x4xf32>
      %c0_16 = arith.constant 0 : index
      %c0_17 = arith.constant 0 : index
      %24 = vector.load %arg4[%c0_16, %c0_17] : memref<1x4xf32, #tpu.memory_space<vmem>>, vector<1x4xf32>
      %c0_18 = arith.constant 0 : index
      %c0_19 = arith.constant 0 : index
      %25 = vector.load %arg5[%c0_18, %c0_19] : memref<4x64xf32, #tpu.memory_space<vmem>>, vector<4x64xf32>
      %c0_20 = arith.constant 0 : index
      %c0_21 = arith.constant 0 : index
      %26 = vector.load %arg6[%c0_20, %c0_21] : memref<1x64xf32, #tpu.memory_space<vmem>>, vector<1x64xf32>
      %cst_22 = arith.constant dense<0.000000e+00> : vector<1x4xf32>
      %27 = tpu.matmul %22, %23, %cst_22 {dimension_numbers = #tpu.dot_dimension_numbers<[1], [0], [0], [1], [0, 0, 1, 1], [], []>} : vector<1x64xf32>, vector<64x4xf32>, vector<1x4xf32> -> vector<1x4xf32>
      %28 = arith.addf %27, %24 : vector<1x4xf32>
      %cst_23 = arith.constant 0.000000e+00 : f32
      %29 = vector.broadcast %cst_23 : f32 to vector<1x4xf32>
      %30 = arith.maximumf %28, %29 : vector<1x4xf32>
      %cst_24 = arith.constant dense<0.000000e+00> : vector<1x64xf32>
      %31 = tpu.matmul %30, %25, %cst_24 {dimension_numbers = #tpu.dot_dimension_numbers<[1], [0], [0], [1], [0, 0, 1, 1], [], []>} : vector<1x4xf32>, vector<4x64xf32>, vector<1x64xf32> -> vector<1x64xf32>
      %32 = arith.addf %31, %26 : vector<1x64xf32>
      %cst_25 = arith.constant 0.000000e+00 : f32
      %33 = vector.broadcast %cst_25 : f32 to vector<1x64xf32>
      %34 = arith.subf %33, %32 : vector<1x64xf32>
      %35 = math.exp %34 : vector<1x64xf32>
      %cst_26 = arith.constant 1.000000e+00 : f32
      %36 = vector.broadcast %cst_26 : f32 to vector<1x64xf32>
      %37 = arith.addf %36, %35 : vector<1x64xf32>
      %cst_27 = arith.constant 1.000000e+00 : f32
      %38 = vector.broadcast %cst_27 : f32 to vector<1x64xf32>
      %39 = arith.divf %38, %37 : vector<1x64xf32>
      %40 = vector.shape_cast %39 : vector<1x64xf32> to vector<1x1x64xf32>
      %c0_28 = arith.constant 0 : index
      %c0_29 = arith.constant 0 : index
      %c0_30 = arith.constant 0 : index
      %41 = vector.load %arg7[%c0_28, %c0_29, %c0_30] : memref<1x1x64xf32, #tpu.memory_space<vmem>>, vector<1x1x64xf32>
      tpu.vector_store %arg7[%c0_28, %c0_29, %c0_30], %40 {strides = array<i32>} : memref<1x1x64xf32, #tpu.memory_space<vmem>>, vector<1x1x64xf32>,
    } else {
    }
    return
  }
  func.func @transform_0(%arg0: i32, %arg1: i32) -> (i32, i32, i32) {
    %c0_i32 = arith.constant 0 : i32
    %c0_i32_0 = arith.constant 0 : i32
    return %arg0, %c0_i32, %arg1 : i32, i32, i32
  }
  func.func @transform_1(%arg0: i32, %arg1: i32) -> (i32, i32) {
    %c0_i32 = arith.constant 0 : i32
    %c0_i32_0 = arith.constant 0 : i32
    %c0_i32_1 = arith.constant 0 : i32
    return %c0_i32, %c0_i32_0 : i32, i32
  }
  func.func @transform_2(%arg0: i32, %arg1: i32) -> (i32, i32) {
    %c0_i32 = arith.constant 0 : i32
    %c0_i32_0 = arith.constant 0 : i32
    %c0_i32_1 = arith.constant 0 : i32
    return %c0_i32, %c0_i32_0 : i32, i32
  }
  func.func @transform_3(%arg0: i32, %arg1: i32) -> (i32, i32) {
    %c0_i32 = arith.constant 0 : i32
    %c0_i32_0 = arith.constant 0 : i32
    %c0_i32_1 = arith.constant 0 : i32
    return %c0_i32, %c0_i32_0 : i32, i32
  }
  func.func @transform_4(%arg0: i32, %arg1: i32) -> (i32, i32) {
    %c0_i32 = arith.constant 0 : i32
    %c0_i32_0 = arith.constant 0 : i32
    %c0_i32_1 = arith.constant 0 : i32
    return %c0_i32, %c0_i32_0 : i32, i32
  }
  func.func @transform_5(%arg0: i32, %arg1: i32) -> (i32, i32, i32) {
    %c0_i32 = arith.constant 0 : i32
    %c0_i32_0 = arith.constant 0 : i32
    %c0_i32_1 = arith.constant 0 : i32
    return %arg0, %c0_i32, %c0_i32_0 : i32, i32, i32
  }
}

</mosaic_0001>

<llo_original>
// kernel: tpu_custom_call.1
$region0: #{tpu_custom_call.1}
  #allocation0 [shape = 'u32[]', space=smem, size = 0x4, offset = 0x4, fixed_abs, tag = 'smem constant byte address 0x4 - core index']
  #allocation1 [shape = 'u32[144,128]{1,0:T(1,128)}', space=vmem, size = 0x12000, scoped, tag = 'internal scratch']
  #allocation2 [shape = 'f32[1,64]{1,0:T(1,128)}', space=vmem, size = 0x200, scoped, tag = 'scratch operand']
  %s0 = inlined_call_operand.hbm [shape: f32[2,64,256], index: 0, kind: input, shape index: {}]
  %s1 = inlined_call_operand.vmem [shape: f32[64,4], index: 1, kind: input, shape index: {}]
  %s2 = inlined_call_operand.vmem [shape: f32[1,4], index: 2, kind: input, shape index: {}]
  %s3 = inlined_call_operand.vmem [shape: f32[4,64], index: 3, kind: input, shape index: {}]
  %s4 = inlined_call_operand.vmem [shape: f32[1,64], index: 4, kind: input, shape index: {}]
  %s5 = inlined_call_operand.hbm [shape: f32[2,1,64], index: 5, kind: output, shape index: {}]
  %s6 = sld [smem:[#allocation0]]
  $region65: #{tpu_custom_call.1} parent=0
    _
  %s8 = ssub.s32 1, %s6
  %s9 = scalar_select 0, %s8, %s6
  $region1: #{tpu_custom_call.1} parent=0
    #allocation3 [shape = 'u8[131072]{0}', space=vmem, size = 0x20000, scoped, tag = 'input window, operand 0']
    #allocation4 [shape = 's32[2]{0}', space=sflag, size = 0x8, scoped, tag = 'scoped memory for tpu_custom_call.1']
    #allocation5 [shape = 's32[2]{0}', space=sflag, size = 0x8, scoped, tag = 'scoped memory for tpu_custom_call.1']
    #allocation6 [shape = 'u8[1024]{0}', space=vmem, size = 0x400, scoped, tag = 'output window, operand 0']
    %10 = vsyncpa [#allocation4], 0
    %s11 = scalar_lea.sflag [#allocation4], 1
    %12 = vsyncpa %s11, 0
    %13 = vsyncpa [#allocation5], 0
    %s14 = scalar_lea.sflag [#allocation5], 1
    %15 = vsyncpa %s14, 0
    loop: start=0, step=1, limit=4
    $region2: #{tpu_custom_call.1} parent=1 // loop_pre_header
      _
    $region3: #{tpu_custom_call.1} parent=1 // loop_header
      %s17 = sphi 0, %s21
      %p18 = scmp.ge.s32.totalorder %s17, 4
      %s24 = sphi 0, %s36
      %s25 = sphi 0, %s32
      %s26 = sphi 0, %s24
      %s27 = sphi 0, %s25
      %s28 = sphi 0, %s26
      %s29 = sphi 0, %s27
      %s41 = sphi 0, %s43
      %s44 = sphi 0, %s41
      %s45 = sphi 0, %s44
      %s61 = sphi 0, %s45
      %s65 = sphi 0, %s65
      %s67 = sphi 0, %s65
      %s68 = sphi 0, %s67
      %s82 = sphi 0, %s68
      %s86 = sphi 0, %s86
      %s88 = sphi 0, %s86
      %s89 = sphi 0, %s88
      %s103 = sphi 0, %s89
      %s107 = sphi 0, %s107
      %s109 = sphi 0, %s107
      %s110 = sphi 0, %s109
      %s124 = sphi 0, %s110
      %s128 = sphi 0, %s128
      %s130 = sphi 0, %s128
      %s131 = sphi 0, %s130
      %s145 = sphi 0, %s131
      %s151 = sphi 0, %s153
      %s154 = sphi 0, %s151
      %s155 = sphi 0, %s154
      %s171 = sphi 0, %s155
    $region4: #{tpu_custom_call.1} parent=1 // loop_header_branch
      %20 = sbr.rel (%p18) target = $region8
    $region5: #{tpu_custom_call.1} parent=1 // loop_body
      %s22 = ssub.s32 %s17, 1
      %s23 = ssub.s32 %s17, 2
      %s30 = sadd.s32 1, %s25
      %p31 = scmp.ge.s32.totalorder %s30, 1
      %s32 = scalar_select %p31, 0, %s30
      %s33 = sadd.s32 1, %s24
      %s34 = scalar_select %p31, %s33, %s24
      %p35 = scmp.ge.s32.totalorder %s34, 2
      %s36 = scalar_select %p35, 0, %s34
      %s37 = ssub.s32 %s24, %s36
      %s38 = ssub.s32 %s25, %s32
      %s39 = sor.u32 %s37, %s38
      %p40 = scmp.eq.s32.totalorder %s39, 0
      %s42 = sadd.s32 %s41, 1
      %s43 = scalar_select %p40, %s41, %s42
      %p46 = pneg %p40
      %p47 = scmp.eq.s32.totalorder %s17, 1
      %p48 = por %p46, %p47
      %p49 = scmp.ne.s32.totalorder %s41, %s44
      %p50 = scmp.eq.s32.totalorder %s17, 0
      %p51 = por %p49, %p50
      %p52 = scmp.ne.s32.totalorder %s41, %s44
      %p53 = scmp.eq.s32.totalorder %s22, 1
      %p54 = por %p52, %p53
      %p55 = scmp.ne.s32.totalorder %s44, %s45
      %p56 = scmp.eq.s32.totalorder %s22, 0
      %p57 = por %p55, %p56
      %p58 = scmp.ne.s32.totalorder %s44, %s45
      %p59 = scmp.eq.s32.totalorder %s23, 1
      %p60 = por %p58, %p59
      %p62 = scmp.ne.s32.totalorder %s45, %s61
      %p63 = scmp.eq.s32.totalorder %s23, 0
      %p64 = por %p62, %p63
      %s66 = sadd.s32 %s65, 1
      %p69 = scmp.eq.s32.totalorder %s17, 1
      %p70 = scmp.ne.s32.totalorder %s65, %s67
      %p71 = scmp.eq.s32.totalorder %s17, 0
      %p72 = por %p70, %p71
      %p73 = scmp.ne.s32.totalorder %s65, %s67
      %p74 = scmp.eq.s32.totalorder %s22, 1
      %p75 = por %p73, %p74
      %p76 = scmp.ne.s32.totalorder %s67, %s68
      %p77 = scmp.eq.s32.totalorder %s22, 0
      %p78 = por %p76, %p77
      %p79 = scmp.ne.s32.totalorder %s67, %s68
      %p80 = scmp.eq.s32.totalorder %s23, 1
      %p81 = por %p79, %p80
      %p83 = scmp.ne.s32.totalorder %s68, %s82
      %p84 = scmp.eq.s32.totalorder %s23, 0
      %p85 = por %p83, %p84
      %s87 = sadd.s32 %s86, 1
      %p90 = scmp.eq.s32.totalorder %s17, 1
      %p91 = scmp.ne.s32.totalorder %s86, %s88
      %p92 = scmp.eq.s32.totalorder %s17, 0
      %p93 = por %p91, %p92
      %p94 = scmp.ne.s32.totalorder %s86, %s88
      %p95 = scmp.eq.s32.totalorder %s22, 1
      %p96 = por %p94, %p95
      %p97 = scmp.ne.s32.totalorder %s88, %s89
      %p98 = scmp.eq.s32.totalorder %s22, 0
      %p99 = por %p97, %p98
      %p100 = scmp.ne.s32.totalorder %s88, %s89
      %p101 = scmp.eq.s32.totalorder %s23, 1
      %p102 = por %p100, %p101
      %p104 = scmp.ne.s32.totalorder %s89, %s103
      %p105 = scmp.eq.s32.totalorder %s23, 0
      %p106 = por %p104, %p105
      %s108 = sadd.s32 %s107, 1
      %p111 = scmp.eq.s32.totalorder %s17, 1
      %p112 = scmp.ne.s32.totalorder %s107, %s109
      %p113 = scmp.eq.s32.totalorder %s17, 0
      %p114 = por %p112, %p113
      %p115 = scmp.ne.s32.totalorder %s107, %s109
      %p116 = scmp.eq.s32.totalorder %s22, 1
      %p117 = por %p115, %p116
      %p118 = scmp.ne.s32.totalorder %s109, %s110
      %p119 = scmp.eq.s32.totalorder %s22, 0
      %p120 = por %p118, %p119
      %p121 = scmp.ne.s32.totalorder %s109, %s110
      %p122 = scmp.eq.s32.totalorder %s23, 1
      %p123 = por %p121, %p122
      %p125 = scmp.ne.s32.totalorder %s110, %s124
      %p126 = scmp.eq.s32.totalorder %s23, 0
      %p127 = por %p125, %p126
      %s129 = sadd.s32 %s128, 1
      %p132 = scmp.eq.s32.totalorder %s17, 1
      %p133 = scmp.ne.s32.totalorder %s128, %s130
      %p134 = scmp.eq.s32.totalorder %s17, 0
      %p135 = por %p133, %p134
      %p136 = scmp.ne.s32.totalorder %s128, %s130
      %p137 = scmp.eq.s32.totalorder %s22, 1
      %p138 = por %p136, %p137
      %p139 = scmp.ne.s32.totalorder %s130, %s131
      %p140 = scmp.eq.s32.totalorder %s22, 0
      %p141 = por %p139, %p140
      %p142 = scmp.ne.s32.totalorder %s130, %s131
      %p143 = scmp.eq.s32.totalorder %s23, 1
      %p144 = por %p142, %p143
      %p146 = scmp.ne.s32.totalorder %s131, %s145
      %p147 = scmp.eq.s32.totalorder %s23, 0
      %p148 = por %p146, %p147
      %s149 = ssub.s32 %s24, %s36
      %p150 = scmp.eq.s32.totalorder %s149, 0
      %s152 = sadd.s32 %s151, 1
      %s153 = scalar_select %p150, %s151, %s152
      %p156 = pneg %p150
      %p157 = scmp.eq.s32.totalorder %s17, 1
      %p158 = por %p156, %p157
      %p159 = scmp.ne.s32.totalorder %s151, %s154
      %p160 = scmp.eq.s32.totalorder %s17, 0
      %p161 = por %p159, %p160
      %p162 = scmp.ne.s32.totalorder %s151, %s154
      %p163 = scmp.eq.s32.totalorder %s22, 1
      %p164 = por %p162, %p163
      %p165 = scmp.ne.s32.totalorder %s154, %s155
      %p166 = scmp.eq.s32.totalorder %s22, 0
      %p167 = por %p165, %p166
      %p168 = scmp.ne.s32.totalorder %s154, %s155
      %p169 = scmp.eq.s32.totalorder %s23, 1
      %p170 = por %p168, %p169
      %p172 = scmp.ne.s32.totalorder %s155, %s171
      %p173 = scmp.eq.s32.totalorder %s23, 0
      %p174 = por %p172, %p173
      %p175 = scmp.le.s32.totalorder 1, %s17
      %p176 = scmp.lt.s32.totalorder %s17, 3
      %p177 = pnand %p175, %p176
      %p178 = pneg %p177
      // Predicated region
      $region9: #{tpu_custom_call.1} parent=5 // pred_check
        _
      $region10: #{tpu_custom_call.1} parent=5 // pred_check_branch
        %180 = sbr.rel (%p177) target = $region12
      $region11: #{tpu_custom_call.1} parent=5 // pred_region
        %s181 = ssub.s32 %s17, 1
        // Predicated region
        $region13: #{tpu_custom_call.1} parent=11 // pred_check
          %p182 = pneg %p78
        $region14: #{tpu_custom_call.1} parent=11 // pred_check_branch
          %184 = sbr.rel (%p182) target = $region16
        $region15: #{tpu_custom_call.1} parent=11 // pred_region
          _
        $region16: #{tpu_custom_call.1} parent=11 // pred_fallthru
          _
        // Predicated region
        $region17: #{tpu_custom_call.1} parent=11 // pred_check
          %p185 = pneg %p99
        $region18: #{tpu_custom_call.1} parent=11 // pred_check_branch
          %187 = sbr.rel (%p185) target = $region20
        $region19: #{tpu_custom_call.1} parent=11 // pred_region
          _
        $region20: #{tpu_custom_call.1} parent=11 // pred_fallthru
          _
        // Predicated region
        $region21: #{tpu_custom_call.1} parent=11 // pred_check
          %p188 = pneg %p120
        $region22: #{tpu_custom_call.1} parent=11 // pred_check_branch
          %190 = sbr.rel (%p188) target = $region24
        $region23: #{tpu_custom_call.1} parent=11 // pred_region
          _
        $region24: #{tpu_custom_call.1} parent=11 // pred_fallthru
          _
        // Predicated region
        $region25: #{tpu_custom_call.1} parent=11 // pred_check
          %p191 = pneg %p141
        $region26: #{tpu_custom_call.1} parent=11 // pred_check_branch
          %193 = sbr.rel (%p191) target = $region28
        $region27: #{tpu_custom_call.1} parent=11 // pred_region
          _
        $region28: #{tpu_custom_call.1} parent=11 // pred_fallthru
          _
      $region12: #{tpu_custom_call.1} parent=5 // pred_fallthru
        _
      %p194 = scmp.lt.s32.totalorder %s17, 2
      // Predicated region
      $region29: #{tpu_custom_call.1} parent=5 // pred_check
        %p195 = pneg %p194
      $region30: #{tpu_custom_call.1} parent=5 // pred_check_branch
        %197 = sbr.rel (%p195) target = $region32
      $region31: #{tpu_custom_call.1} parent=5 // pred_region
        // Predicated region
        $region33: #{tpu_custom_call.1} parent=31 // pred_check
          %p198 = pneg %p51
        $region34: #{tpu_custom_call.1} parent=31 // pred_check_branch
          %200 = sbr.rel (%p198) target = $region36
        $region35: #{tpu_custom_call.1} parent=31 // pred_region
          %s201 = sand.u32 %s41, 1
          %s202 = scalar_lea.sflag [#allocation4], %s201
          %s203 = sand.u32 %s41, 1
          %s204 = smul.addr %s203, 128
          %s205 = scalar_lea.vmem [#allocation3], %s204
          %s206 = smul.u32 2, %s25
          %s208 = ssub.s32 2048, 2048
          %209 = vsyncadd %s202, %s208
          %s210 = smul.addr %s24, 16
          %s211 = sadd.s32 %s206, %s210
          %s212 = smul.addr %s211, 128
          %s213 = scalar_lea.hbm %s0, %s212
          %s214 = sshll.u32 %s205, 4
          %s215 = int_to_ptr.vmem [resolvable:$true] %s214
          %220 = dma.hbm_to_vmem [thread:$0]  %s213, 2048, %s215, %s202, 256, 256, 16
        $region36: #{tpu_custom_call.1} parent=31 // pred_fallthru
          _
      $region32: #{tpu_custom_call.1} parent=5 // pred_fallthru
        _
      %p221 = scmp.le.s32.totalorder 1, %s17
      %p222 = scmp.lt.s32.totalorder %s17, 3
      %p223 = pnand %p221, %p222
      %p224 = pneg %p223
      // Predicated region
      $region37: #{tpu_custom_call.1} parent=5 // pred_check
        _
      $region38: #{tpu_custom_call.1} parent=5 // pred_check_branch
        %226 = sbr.rel (%p223) target = $region40
      $region39: #{tpu_custom_call.1} parent=5 // pred_region
        %s227 = ssub.s32 %s17, 1
        %s228 = sand.u32 %s44, 1
        %s229 = scalar_lea.sflag [#allocation4], %s228
        %s230 = sand.u32 %s44, 1
        %s231 = smul.addr %s230, 128
        %s232 = scalar_lea.vmem [#allocation3], %s231
        // Predicated region
        $region41: #{tpu_custom_call.1} parent=39 // pred_check
          %p233 = pneg %p57
        $region42: #{tpu_custom_call.1} parent=39 // pred_check_branch
          %235 = sbr.rel (%p233) target = $region44
        $region43: #{tpu_custom_call.1} parent=39 // pred_region
          %236 = dma.done %s229, 2048
        $region44: #{tpu_custom_call.1} parent=39 // pred_fallthru
          _
        %s237 = sand.u32 %s44, 1
        %s238 = scalar_lea.sflag [#allocation4], %s237
        %s239 = sand.u32 %s44, 1
        %s240 = smul.addr %s239, 128
        %s241 = scalar_lea.vmem [#allocation3], %s240
        %p242 = pneg %p57
        %p243 = pneg %p54
        %p244 = pneg %p78
        %p245 = pneg %p75
        %p246 = pneg %p99
        %p247 = pneg %p96
        %p248 = pneg %p120
        %p249 = pneg %p117
        %p250 = pneg %p141
        %p251 = pneg %p138
        %p252 = pneg %p167
        %p253 = pneg %p164
        %s254 = sand.u32 %s154, 1
        %s255 = scalar_lea.sflag [#allocation5], %s254
        %s256 = sand.u32 %s154, 1
        %s257 = scalar_lea.vmem [#allocation6], %s256
        %s258 = smul.u32 2, %s27
        %p259 = scmp.eq.s32.totalorder %s27, 0
        // Predicated region
        $region45: #{tpu_custom_call.1} parent=39 // pred_check
          %p260 = pneg %p259
        $region46: #{tpu_custom_call.1} parent=39 // pred_check_branch
          %262 = sbr.rel (%p260) target = $region48
        $region47: #{tpu_custom_call.1} parent=39 // pred_region
          %vm263 = vcmask 516096
          %264 = vst.msk [vmem:[#allocation2] sm:$0x1] %vm263, 0.0
        $region48: #{tpu_custom_call.1} parent=39 // pred_fallthru
          _
        %v265 = vld [vmem:[%s232] sm:$0xff]
        %v266 = vld [vmem:[%s232 + $0x8] sm:$0xff]
        %v267 = vld [vmem:[%s232 + $0x10] sm:$0xff]
        %v268 = vld [vmem:[%s232 + $0x18] sm:$0xff]
        %v269 = vld [vmem:[%s232 + $0x20] sm:$0xff]
        %v270 = vld [vmem:[%s232 + $0x28] sm:$0xff]
        %v271 = vld [vmem:[%s232 + $0x30] sm:$0xff]
        %v272 = vld [vmem:[%s232 + $0x38] sm:$0xff]
        %v273 = vld [vmem:[%s232 + $0x40] sm:$0xff]
        %v274 = vld [vmem:[%s232 + $0x48] sm:$0xff]
        %v275 = vld [vmem:[%s232 + $0x50] sm:$0xff]
        %v276 = vld [vmem:[%s232 + $0x58] sm:$0xff]
        %v277 = vld [vmem:[%s232 + $0x60] sm:$0xff]
        %v278 = vld [vmem:[%s232 + $0x68] sm:$0xff]
        %v279 = vld [vmem:[%s232 + $0x70] sm:$0xff]
        %v280 = vld [vmem:[%s232 + $0x78] sm:$0xff]
        %v281 = vlaneseq
        %v282 = vand.u32 %v281, 127
        %v283 = vadd.s32 %v282, 128
        %s284 = smul.u32 %s27, 256
        %s285 = ssub.s32 256, %s284
        %v286 = vstv %s285
        %vm287 = vcmp.lt.s32.totalorder %v282, %v286
        %vm288 = vcmp.lt.s32.totalorder %v283, %v286
        %v289 = vsel %vm287, %v265, 0.0
        %v290 = vsel %vm288, %v266, 0.0
        %v291 = vsel %vm287, %v267, 0.0
        %v292 = vsel %vm288, %v268, 0.0
        %v293 = vsel %vm287, %v269, 0.0
        %v294 = vsel %vm288, %v270, 0.0
        %v295 = vsel %vm287, %v271, 0.0
        %v296 = vsel %vm288, %v272, 0.0
        %v297 = vsel %vm287, %v273, 0.0
        %v298 = vsel %vm288, %v274, 0.0
        %v299 = vsel %vm287, %v275, 0.0
        %v300 = vsel %vm288, %v276, 0.0
        %v301 = vsel %vm287, %v277, 0.0
        %v302 = vsel %vm288, %v278, 0.0
        %v303 = vsel %vm287, %v279, 0.0
        %v304 = vsel %vm288, %v280, 0.0
        %v305 = vld [vmem:[#allocation2] sm:$0x1]
        %v306 = vadd.f32 %v289, %v290
        %307 = vadd.xlane.f32.xlu0 %v306
        %v308 = vpop.xlane.xlu0 %307
        %v309 = vadd.f32 %v291, %v292
        %310 = vadd.xlane.f32.xlu0 %v309
        %v311 = vpop.xlane.xlu0 %310
        %v312 = vadd.f32 %v293, %v294
        %313 = vadd.xlane.f32.xlu0 %v312
        %v314 = vpop.xlane.xlu0 %313
        %v315 = vadd.f32 %v295, %v296
        %316 = vadd.xlane.f32.xlu0 %v315
        %v317 = vpop.xlane.xlu0 %316
        %v318 = vadd.f32 %v297, %v298
        %319 = vadd.xlane.f32.xlu0 %v318
        %v320 = vpop.xlane.xlu0 %319
        %v321 = vadd.f32 %v299, %v300
        %322 = vadd.xlane.f32.xlu0 %v321
        %v323 = vpop.xlane.xlu0 %322
        %v324 = vadd.f32 %v301, %v302
        %325 = vadd.xlane.f32.xlu0 %v324
        %v326 = vpop.xlane.xlu0 %325
        %v327 = vadd.f32 %v303, %v304
        %328 = vadd.xlane.f32.xlu0 %v327
        %v329 = vpop.xlane.xlu0 %328
        %v338 = vlaneseq
        %v339 = vshrl.u32 %v338, 7
        %v340 = vsub.s32 0, %v339
        %v341 = vrot.slane %v308, %v340
        %v342 = vlaneseq
        %v343 = vshrl.u32 %v342, 7
        %v344 = vsub.s32 1, %v343
        %v345 = vrot.slane %v308, %v344
        %v346 = vlaneseq
        %v347 = vshrl.u32 %v346, 7
        %v348 = vsub.s32 2, %v347
        %v349 = vrot.slane %v308, %v348
        %v350 = vlaneseq
        %v351 = vshrl.u32 %v350, 7
        %v352 = vsub.s32 3, %v351
        %v353 = vrot.slane %v308, %v352
        %v354 = vlaneseq
        %v355 = vshrl.u32 %v354, 7
        %v356 = vsub.s32 4, %v355
        %v357 = vrot.slane %v308, %v356
        %v358 = vlaneseq
        %v359 = vshrl.u32 %v358, 7
        %v360 = vsub.s32 5, %v359
        %v361 = vrot.slane %v308, %v360
        %v362 = vlaneseq
        %v363 = vshrl.u32 %v362, 7
        %v364 = vsub.s32 6, %v363
        %v365 = vrot.slane %v308, %v364
        %v366 = vlaneseq
        %v367 = vshrl.u32 %v366, 7
        %v368 = vsub.s32 7, %v367
        %v369 = vrot.slane %v308, %v368
        %v370 = vlaneseq
        %v371 = vshrl.u32 %v370, 7
        %v372 = vsub.s32 0, %v371
        %v373 = vrot.slane %v311, %v372
        %v374 = vlaneseq
        %v375 = vshrl.u32 %v374, 7
        %v376 = vsub.s32 1, %v375
        %v377 = vrot.slane %v311, %v376
        %v378 = vlaneseq
        %v379 = vshrl.u32 %v378, 7
        %v380 = vsub.s32 2, %v379
        %v381 = vrot.slane %v311, %v380
        %v382 = vlaneseq
        %v383 = vshrl.u32 %v382, 7
        %v384 = vsub.s32 3, %v383
        %v385 = vrot.slane %v311, %v384
        %v386 = vlaneseq
        %v387 = vshrl.u32 %v386, 7
        %v388 = vsub.s32 4, %v387
        %v389 = vrot.slane %v311, %v388
        %v390 = vlaneseq
        %v391 = vshrl.u32 %v390, 7
        %v392 = vsub.s32 5, %v391
        %v393 = vrot.slane %v311, %v392
        %v394 = vlaneseq
        %v395 = vshrl.u32 %v394, 7
        %v396 = vsub.s32 6, %v395
        %v397 = vrot.slane %v311, %v396
        %v398 = vlaneseq
        %v399 = vshrl.u32 %v398, 7
        %v400 = vsub.s32 7, %v399
        %v401 = vrot.slane %v311, %v400
        %v402 = vlaneseq
        %v403 = vshrl.u32 %v402, 7
        %v404 = vsub.s32 0, %v403
        %v405 = vrot.slane %v314, %v404
        %v406 = vlaneseq
        %v407 = vshrl.u32 %v406, 7
        %v408 = vsub.s32 1, %v407
        %v409 = vrot.slane %v314, %v408
        %v410 = vlaneseq
        %v411 = vshrl.u32 %v410, 7
        %v412 = vsub.s32 2, %v411
        %v413 = vrot.slane %v314, %v412
        %v414 = vlaneseq
        %v415 = vshrl.u32 %v414, 7
        %v416 = vsub.s32 3, %v415
        %v417 = vrot.slane %v314, %v416
        %v418 = vlaneseq
        %v419 = vshrl.u32 %v418, 7
        %v420 = vsub.s32 4, %v419
        %v421 = vrot.slane %v314, %v420
        %v422 = vlaneseq
        %v423 = vshrl.u32 %v422, 7
        %v424 = vsub.s32 5, %v423
        %v425 = vrot.slane %v314, %v424
        %v426 = vlaneseq
        %v427 = vshrl.u32 %v426, 7
        %v428 = vsub.s32 6, %v427
        %v429 = vrot.slane %v314, %v428
        %v430 = vlaneseq
        %v431 = vshrl.u32 %v430, 7
        %v432 = vsub.s32 7, %v431
        %v433 = vrot.slane %v314, %v432
        %v434 = vlaneseq
        %v435 = vshrl.u32 %v434, 7
        %v436 = vsub.s32 0, %v435
        %v437 = vrot.slane %v317, %v436
        %v438 = vlaneseq
        %v439 = vshrl.u32 %v438, 7
        %v440 = vsub.s32 1, %v439
        %v441 = vrot.slane %v317, %v440
        %v442 = vlaneseq
        %v443 = vshrl.u32 %v442, 7
        %v444 = vsub.s32 2, %v443
        %v445 = vrot.slane %v317, %v444
        %v446 = vlaneseq
        %v447 = vshrl.u32 %v446, 7
        %v448 = vsub.s32 3, %v447
        %v449 = vrot.slane %v317, %v448
        %v450 = vlaneseq
        %v451 = vshrl.u32 %v450, 7
        %v452 = vsub.s32 4, %v451
        %v453 = vrot.slane %v317, %v452
        %v454 = vlaneseq
        %v455 = vshrl.u32 %v454, 7
        %v456 = vsub.s32 5, %v455
        %v457 = vrot.slane %v317, %v456
        %v458 = vlaneseq
        %v459 = vshrl.u32 %v458, 7
        %v460 = vsub.s32 6, %v459
        %v461 = vrot.slane %v317, %v460
        %v462 = vlaneseq
        %v463 = vshrl.u32 %v462, 7
        %v464 = vsub.s32 7, %v463
        %v465 = vrot.slane %v317, %v464
        %v466 = vlaneseq
        %v467 = vshrl.u32 %v466, 7
        %v468 = vsub.s32 0, %v467
        %v469 = vrot.slane %v320, %v468
        %v470 = vlaneseq
        %v471 = vshrl.u32 %v470, 7
        %v472 = vsub.s32 1, %v471
        %v473 = vrot.slane %v320, %v472
        %v474 = vlaneseq
        %v475 = vshrl.u32 %v474, 7
        %v476 = vsub.s32 2, %v475
        %v477 = vrot.slane %v320, %v476
        %v478 = vlaneseq
        %v479 = vshrl.u32 %v478, 7
        %v480 = vsub.s32 3, %v479
        %v481 = vrot.slane %v320, %v480
        %v482 = vlaneseq
        %v483 = vshrl.u32 %v482, 7
        %v484 = vsub.s32 4, %v483
        %v485 = vrot.slane %v320, %v484
        %v486 = vlaneseq
        %v487 = vshrl.u32 %v486, 7
        %v488 = vsub.s32 5, %v487
        %v489 = vrot.slane %v320, %v488
        %v490 = vlaneseq
        %v491 = vshrl.u32 %v490, 7
        %v492 = vsub.s32 6, %v491
        %v493 = vrot.slane %v320, %v492
        %v494 = vlaneseq
        %v495 = vshrl.u32 %v494, 7
        %v496 = vsub.s32 7, %v495
        %v497 = vrot.slane %v320, %v496
        %v498 = vlaneseq
        %v499 = vshrl.u32 %v498, 7
        %v500 = vsub.s32 0, %v499
        %v501 = vrot.slane %v323, %v500
        %v502 = vlaneseq
        %v503 = vshrl.u32 %v502, 7
        %v504 = vsub.s32 1, %v503
        %v505 = vrot.slane %v323, %v504
        %v506 = vlaneseq
        %v507 = vshrl.u32 %v506, 7
        %v508 = vsub.s32 2, %v507
        %v509 = vrot.slane %v323, %v508
        %v510 = vlaneseq
        %v511 = vshrl.u32 %v510, 7
        %v512 = vsub.s32 3, %v511
        %v513 = vrot.slane %v323, %v512
        %v514 = vlaneseq
        %v515 = vshrl.u32 %v514, 7
        %v516 = vsub.s32 4, %v515
        %v517 = vrot.slane %v323, %v516
        %v518 = vlaneseq
        %v519 = vshrl.u32 %v518, 7
        %v520 = vsub.s32 5, %v519
        %v521 = vrot.slane %v323, %v520
        %v522 = vlaneseq
        %v523 = vshrl.u32 %v522, 7
        %v524 = vsub.s32 6, %v523
        %v525 = vrot.slane %v323, %v524
        %v526 = vlaneseq
        %v527 = vshrl.u32 %v526, 7
        %v528 = vsub.s32 7, %v527
        %v529 = vrot.slane %v323, %v528
        %v530 = vlaneseq
        %v531 = vshrl.u32 %v530, 7
        %v532 = vsub.s32 0, %v531
        %v533 = vrot.slane %v326, %v532
        %v534 = vlaneseq
        %v535 = vshrl.u32 %v534, 7
        %v536 = vsub.s32 1, %v535
        %v537 = vrot.slane %v326, %v536
        %v538 = vlaneseq
        %v539 = vshrl.u32 %v538, 7
        %v540 = vsub.s32 2, %v539
        %v541 = vrot.slane %v326, %v540
        %v542 = vlaneseq
        %v543 = vshrl.u32 %v542, 7
        %v544 = vsub.s32 3, %v543
        %v545 = vrot.slane %v326, %v544
        %v546 = vlaneseq
        %v547 = vshrl.u32 %v546, 7
        %v548 = vsub.s32 4, %v547
        %v549 = vrot.slane %v326, %v548
        %v550 = vlaneseq
        %v551 = vshrl.u32 %v550, 7
        %v552 = vsub.s32 5, %v551
        %v553 = vrot.slane %v326, %v552
        %v554 = vlaneseq
        %v555 = vshrl.u32 %v554, 7
        %v556 = vsub.s32 6, %v555
        %v557 = vrot.slane %v326, %v556
        %v558 = vlaneseq
        %v559 = vshrl.u32 %v558, 7
        %v560 = vsub.s32 7, %v559
        %v561 = vrot.slane %v326, %v560
        %v562 = vlaneseq
        %v563 = vshrl.u32 %v562, 7
        %v564 = vsub.s32 0, %v563
        %v565 = vrot.slane %v329, %v564
        %v566 = vlaneseq
        %v567 = vshrl.u32 %v566, 7
        %v568 = vsub.s32 1, %v567
        %v569 = vrot.slane %v329, %v568
        %v570 = vlaneseq
        %v571 = vshrl.u32 %v570, 7
        %v572 = vsub.s32 2, %v571
        %v573 = vrot.slane %v329, %v572
        %v574 = vlaneseq
        %v575 = vshrl.u32 %v574, 7
        %v576 = vsub.s32 3, %v575
        %v577 = vrot.slane %v329, %v576
        %v578 = vlaneseq
        %v579 = vshrl.u32 %v578, 7
        %v580 = vsub.s32 4, %v579
        %v581 = vrot.slane %v329, %v580
        %v582 = vlaneseq
        %v583 = vshrl.u32 %v582, 7
        %v584 = vsub.s32 5, %v583
        %v585 = vrot.slane %v329, %v584
        %v586 = vlaneseq
        %v587 = vshrl.u32 %v586, 7
        %v588 = vsub.s32 6, %v587
        %v589 = vrot.slane %v329, %v588
        %v590 = vlaneseq
        %v591 = vshrl.u32 %v590, 7
        %v592 = vsub.s32 7, %v591
        %v593 = vrot.slane %v329, %v592
        %v594 = vcombine.low %v341, %v345
        %v595 = vcombine.low %v349, %v353
        %v596 = vcombine.low %v357, %v361
        %v597 = vcombine.low %v365, %v369
        %v599 = vunpack.c.l.s4 1966171168
        %v600 = vunpack.c.0.s8 %v599
        %v601 = vlaneseq
        %v602 = vshrl.u32 %v601, 7
        %v603 = vsub.s32 %v600, %v602
        %v604 = vrot.slane %v594, %v603
        %v606 = vunpack.c.l.s4 1966171168
        %v607 = vunpack.c.0.s8 %v606
        %v608 = vlaneseq
        %v609 = vshrl.u32 %v608, 7
        %v610 = vsub.s32 %v607, %v609
        %v611 = vrot.slane %v595, %v610
        %v613 = vunpack.c.l.s4 1966171168
        %v614 = vunpack.c.0.s8 %v613
        %v615 = vlaneseq
        %v616 = vshrl.u32 %v615, 7
        %v617 = vsub.s32 %v614, %v616
        %v618 = vrot.slane %v596, %v617
        %v620 = vunpack.c.l.s4 1966171168
        %v621 = vunpack.c.0.s8 %v620
        %v622 = vlaneseq
        %v623 = vshrl.u32 %v622, 7
        %v624 = vsub.s32 %v621, %v623
        %v625 = vrot.slane %v597, %v624
        %v626 = vcombine.low %v604, %v611
        %v627 = vcombine.low %v618, %v625
        %v629 = vunpack.c.l.s4 1966171168
        %v630 = vunpack.c.0.s8 %v629
        %v631 = vlaneseq
        %v632 = vshrl.u32 %v631, 7
        %v633 = vsub.s32 %v630, %v632
        %v634 = vrot.slane %v626, %v633
        %v636 = vunpack.c.l.s4 1966171168
        %v637 = vunpack.c.0.s8 %v636
        %v638 = vlaneseq
        %v639 = vshrl.u32 %v638, 7
        %v640 = vsub.s32 %v637, %v639
        %v641 = vrot.slane %v627, %v640
        %v642 = vcombine.low %v634, %v641
        %v643 = vcombine.low %v373, %v377
        %v644 = vcombine.low %v381, %v385
        %v645 = vcombine.low %v389, %v393
        %v646 = vcombine.low %v397, %v401
        %v648 = vunpack.c.l.s4 1966171168
        %v649 = vunpack.c.0.s8 %v648
        %v650 = vlaneseq
        %v651 = vshrl.u32 %v650, 7
        %v652 = vsub.s32 %v649, %v651
        %v653 = vrot.slane %v643, %v652
        %v655 = vunpack.c.l.s4 1966171168
        %v656 = vunpack.c.0.s8 %v655
        %v657 = vlaneseq
        %v658 = vshrl.u32 %v657, 7
        %v659 = vsub.s32 %v656, %v658
        %v660 = vrot.slane %v644, %v659
        %v662 = vunpack.c.l.s4 1966171168
        %v663 = vunpack.c.0.s8 %v662
        %v664 = vlaneseq
        %v665 = vshrl.u32 %v664, 7
        %v666 = vsub.s32 %v663, %v665
        %v667 = vrot.slane %v645, %v666
        %v669 = vunpack.c.l.s4 1966171168
        %v670 = vunpack.c.0.s8 %v669
        %v671 = vlaneseq
        %v672 = vshrl.u32 %v671, 7
        %v673 = vsub.s32 %v670, %v672
        %v674 = vrot.slane %v646, %v673
        %v675 = vcombine.low %v653, %v660
        %v676 = vcombine.low %v667, %v674
        %v678 = vunpack.c.l.s4 1966171168
        %v679 = vunpack.c.0.s8 %v678
        %v680 = vlaneseq
        %v681 = vshrl.u32 %v680, 7
        %v682 = vsub.s32 %v679, %v681
        %v683 = vrot.slane %v675, %v682
        %v685 = vunpack.c.l.s4 1966171168
        %v686 = vunpack.c.0.s8 %v685
        %v687 = vlaneseq
        %v688 = vshrl.u32 %v687, 7
        %v689 = vsub.s32 %v686, %v688
        %v690 = vrot.slane %v676, %v689
        %v691 = vcombine.low %v683, %v690
        %v692 = vcombine.low %v405, %v409
        %v693 = vcombine.low %v413, %v417
        %v694 = vcombine.low %v421, %v425
        %v695 = vcombine.low %v429, %v433
        %v697 = vunpack.c.l.s4 1966171168
        %v698 = vunpack.c.0.s8 %v697
        %v699 = vlaneseq
        %v700 = vshrl.u32 %v699, 7
        %v701 = vsub.s32 %v698, %v700
        %v702 = vrot.slane %v692, %v701
        %v704 = vunpack.c.l.s4 1966171168
        %v705 = vunpack.c.0.s8 %v704
        %v706 = vlaneseq
        %v707 = vshrl.u32 %v706, 7
        %v708 = vsub.s32 %v705, %v707
        %v709 = vrot.slane %v693, %v708
        %v711 = vunpack.c.l.s4 1966171168
        %v712 = vunpack.c.0.s8 %v711
        %v713 = vlaneseq
        %v714 = vshrl.u32 %v713, 7
        %v715 = vsub.s32 %v712, %v714
        %v716 = vrot.slane %v694, %v715
        %v718 = vunpack.c.l.s4 1966171168
        %v719 = vunpack.c.0.s8 %v718
        %v720 = vlaneseq
        %v721 = vshrl.u32 %v720, 7
        %v722 = vsub.s32 %v719, %v721
        %v723 = vrot.slane %v695, %v722
        %v724 = vcombine.low %v702, %v709
        %v725 = vcombine.low %v716, %v723
        %v727 = vunpack.c.l.s4 1966171168
        %v728 = vunpack.c.0.s8 %v727
        %v729 = vlaneseq
        %v730 = vshrl.u32 %v729, 7
        %v731 = vsub.s32 %v728, %v730
        %v732 = vrot.slane %v724, %v731
        %v734 = vunpack.c.l.s4 1966171168
        %v735 = vunpack.c.0.s8 %v734
        %v736 = vlaneseq
        %v737 = vshrl.u32 %v736, 7
        %v738 = vsub.s32 %v735, %v737
        %v739 = vrot.slane %v725, %v738
        %v740 = vcombine.low %v732, %v739
        %v741 = vcombine.low %v437, %v441
        %v742 = vcombine.low %v445, %v449
        %v743 = vcombine.low %v453, %v457
        %v744 = vcombine.low %v461, %v465
        %v746 = vunpack.c.l.s4 1966171168
        %v747 = vunpack.c.0.s8 %v746
        %v748 = vlaneseq
        %v749 = vshrl.u32 %v748, 7
        %v750 = vsub.s32 %v747, %v749
        %v751 = vrot.slane %v741, %v750
        %v753 = vunpack.c.l.s4 1966171168
        %v754 = vunpack.c.0.s8 %v753
        %v755 = vlaneseq
        %v756 = vshrl.u32 %v755, 7
        %v757 = vsub.s32 %v754, %v756
        %v758 = vrot.slane %v742, %v757
        %v760 = vunpack.c.l.s4 1966171168
        %v761 = vunpack.c.0.s8 %v760
        %v762 = vlaneseq
        %v763 = vshrl.u32 %v762, 7
        %v764 = vsub.s32 %v761, %v763
        %v765 = vrot.slane %v743, %v764
        %v767 = vunpack.c.l.s4 1966171168
        %v768 = vunpack.c.0.s8 %v767
        %v769 = vlaneseq
        %v770 = vshrl.u32 %v769, 7
        %v771 = vsub.s32 %v768, %v770
        %v772 = vrot.slane %v744, %v771
        %v773 = vcombine.low %v751, %v758
        %v774 = vcombine.low %v765, %v772
        %v776 = vunpack.c.l.s4 1966171168
        %v777 = vunpack.c.0.s8 %v776
        %v778 = vlaneseq
        %v779 = vshrl.u32 %v778, 7
        %v780 = vsub.s32 %v777, %v779
        %v781 = vrot.slane %v773, %v780
        %v783 = vunpack.c.l.s4 1966171168
        %v784 = vunpack.c.0.s8 %v783
        %v785 = vlaneseq
        %v786 = vshrl.u32 %v785, 7
        %v787 = vsub.s32 %v784, %v786
        %v788 = vrot.slane %v774, %v787
        %v789 = vcombine.low %v781, %v788
        %v790 = vcombine.low %v469, %v473
        %v791 = vcombine.low %v477, %v481
        %v792 = vcombine.low %v485, %v489
        %v793 = vcombine.low %v493, %v497
        %v795 = vunpack.c.l.s4 1966171168
        %v796 = vunpack.c.0.s8 %v795
        %v797 = vlaneseq
        %v798 = vshrl.u32 %v797, 7
        %v799 = vsub.s32 %v796, %v798
        %v800 = vrot.slane %v790, %v799
        %v802 = vunpack.c.l.s4 1966171168
        %v803 = vunpack.c.0.s8 %v802
        %v804 = vlaneseq
        %v805 = vshrl.u32 %v804, 7
        %v806 = vsub.s32 %v803, %v805
        %v807 = vrot.slane %v791, %v806
        %v809 = vunpack.c.l.s4 1966171168
        %v810 = vunpack.c.0.s8 %v809
        %v811 = vlaneseq
        %v812 = vshrl.u32 %v811, 7
        %v813 = vsub.s32 %v810, %v812
        %v814 = vrot.slane %v792, %v813
        %v816 = vunpack.c.l.s4 1966171168
        %v817 = vunpack.c.0.s8 %v816
        %v818 = vlaneseq
        %v819 = vshrl.u32 %v818, 7
        %v820 = vsub.s32 %v817, %v819
        %v821 = vrot.slane %v793, %v820
        %v822 = vcombine.low %v800, %v807
        %v823 = vcombine.low %v814, %v821
        %v825 = vunpack.c.l.s4 1966171168
        %v826 = vunpack.c.0.s8 %v825
        %v827 = vlaneseq
        %v828 = vshrl.u32 %v827, 7
        %v829 = vsub.s32 %v826, %v828
        %v830 = vrot.slane %v822, %v829
        %v832 = vunpack.c.l.s4 1966171168
        %v833 = vunpack.c.0.s8 %v832
        %v834 = vlaneseq
        %v835 = vshrl.u32 %v834, 7
        %v836 = vsub.s32 %v833, %v835
        %v837 = vrot.slane %v823, %v836
        %v838 = vcombine.low %v830, %v837
        %v839 = vcombine.low %v501, %v505
        %v840 = vcombine.low %v509, %v513
        %v841 = vcombine.low %v517, %v521
        %v842 = vcombine.low %v525, %v529
        %v844 = vunpack.c.l.s4 1966171168
        %v845 = vunpack.c.0.s8 %v844
        %v846 = vlaneseq
        %v847 = vshrl.u32 %v846, 7
        %v848 = vsub.s32 %v845, %v847
        %v849 = vrot.slane %v839, %v848
        %v851 = vunpack.c.l.s4 1966171168
        %v852 = vunpack.c.0.s8 %v851
        %v853 = vlaneseq
        %v854 = vshrl.u32 %v853, 7
        %v855 = vsub.s32 %v852, %v854
        %v856 = vrot.slane %v840, %v855
        %v858 = vunpack.c.l.s4 1966171168
        %v859 = vunpack.c.0.s8 %v858
        %v860 = vlaneseq
        %v861 = vshrl.u32 %v860, 7
        %v862 = vsub.s32 %v859, %v861
        %v863 = vrot.slane %v841, %v862
        %v865 = vunpack.c.l.s4 1966171168
        %v866 = vunpack.c.0.s8 %v865
        %v867 = vlaneseq
        %v868 = vshrl.u32 %v867, 7
        %v869 = vsub.s32 %v866, %v868
        %v870 = vrot.slane %v842, %v869
        %v871 = vcombine.low %v849, %v856
        %v872 = vcombine.low %v863, %v870
        %v874 = vunpack.c.l.s4 1966171168
        %v875 = vunpack.c.0.s8 %v874
        %v876 = vlaneseq
        %v877 = vshrl.u32 %v876, 7
        %v878 = vsub.s32 %v875, %v877
        %v879 = vrot.slane %v871, %v878
        %v881 = vunpack.c.l.s4 1966171168
        %v882 = vunpack.c.0.s8 %v881
        %v883 = vlaneseq
        %v884 = vshrl.u32 %v883, 7
        %v885 = vsub.s32 %v882, %v884
        %v886 = vrot.slane %v872, %v885
        %v887 = vcombine.low %v879, %v886
        %v888 = vcombine.low %v533, %v537
        %v889 = vcombine.low %v541, %v545
        %v890 = vcombine.low %v549, %v553
        %v891 = vcombine.low %v557, %v561
        %v893 = vunpack.c.l.s4 1966171168
        %v894 = vunpack.c.0.s8 %v893
        %v895 = vlaneseq
        %v896 = vshrl.u32 %v895, 7
        %v897 = vsub.s32 %v894, %v896
        %v898 = vrot.slane %v888, %v897
        %v900 = vunpack.c.l.s4 1966171168
        %v901 = vunpack.c.0.s8 %v900
        %v902 = vlaneseq
        %v903 = vshrl.u32 %v902, 7
        %v904 = vsub.s32 %v901, %v903
        %v905 = vrot.slane %v889, %v904
        %v907 = vunpack.c.l.s4 1966171168
        %v908 = vunpack.c.0.s8 %v907
        %v909 = vlaneseq
        %v910 = vshrl.u32 %v909, 7
        %v911 = vsub.s32 %v908, %v910
        %v912 = vrot.slane %v890, %v911
        %v914 = vunpack.c.l.s4 1966171168
        %v915 = vunpack.c.0.s8 %v914
        %v916 = vlaneseq
        %v917 = vshrl.u32 %v916, 7
        %v918 = vsub.s32 %v915, %v917
        %v919 = vrot.slane %v891, %v918
        %v920 = vcombine.low %v898, %v905
        %v921 = vcombine.low %v912, %v919
        %v923 = vunpack.c.l.s4 1966171168
        %v924 = vunpack.c.0.s8 %v923
        %v925 = vlaneseq
        %v926 = vshrl.u32 %v925, 7
        %v927 = vsub.s32 %v924, %v926
        %v928 = vrot.slane %v920, %v927
        %v930 = vunpack.c.l.s4 1966171168
        %v931 = vunpack.c.0.s8 %v930
        %v932 = vlaneseq
        %v933 = vshrl.u32 %v932, 7
        %v934 = vsub.s32 %v931, %v933
        %v935 = vrot.slane %v921, %v934
        %v936 = vcombine.low %v928, %v935
        %v937 = vcombine.low %v565, %v569
        %v938 = vcombine.low %v573, %v577
        %v939 = vcombine.low %v581, %v585
        %v940 = vcombine.low %v589, %v593
        %v942 = vunpack.c.l.s4 1966171168
        %v943 = vunpack.c.0.s8 %v942
        %v944 = vlaneseq
        %v945 = vshrl.u32 %v944, 7
        %v946 = vsub.s32 %v943, %v945
        %v947 = vrot.slane %v937, %v946
        %v949 = vunpack.c.l.s4 1966171168
        %v950 = vunpack.c.0.s8 %v949
        %v951 = vlaneseq
        %v952 = vshrl.u32 %v951, 7
        %v953 = vsub.s32 %v950, %v952
        %v954 = vrot.slane %v938, %v953
        %v956 = vunpack.c.l.s4 1966171168
        %v957 = vunpack.c.0.s8 %v956
        %v958 = vlaneseq
        %v959 = vshrl.u32 %v958, 7
        %v960 = vsub.s32 %v957, %v959
        %v961 = vrot.slane %v939, %v960
        %v963 = vunpack.c.l.s4 1966171168
        %v964 = vunpack.c.0.s8 %v963
        %v965 = vlaneseq
        %v966 = vshrl.u32 %v965, 7
        %v967 = vsub.s32 %v964, %v966
        %v968 = vrot.slane %v940, %v967
        %v969 = vcombine.low %v947, %v954
        %v970 = vcombine.low %v961, %v968
        %v972 = vunpack.c.l.s4 1966171168
        %v973 = vunpack.c.0.s8 %v972
        %v974 = vlaneseq
        %v975 = vshrl.u32 %v974, 7
        %v976 = vsub.s32 %v973, %v975
        %v977 = vrot.slane %v969, %v976
        %v979 = vunpack.c.l.s4 1966171168
        %v980 = vunpack.c.0.s8 %v979
        %v981 = vlaneseq
        %v982 = vshrl.u32 %v981, 7
        %v983 = vsub.s32 %v980, %v982
        %v984 = vrot.slane %v970, %v983
        %v985 = vcombine.low %v977, %v984
        %986 = vset.pattern.permute.xlu0 0
        %987 = vperm.xlu0 %986, %v642
        %v988 = vpop.permute.xlu0 %987
        %989 = vset.pattern.permute.xlu0 0
        %990 = vperm.xlu0 %989, %v691
        %v991 = vpop.permute.xlu0 %990
        %992 = vset.pattern.permute.xlu0 0
        %993 = vperm.xlu0 %992, %v740
        %v994 = vpop.permute.xlu0 %993
        %995 = vset.pattern.permute.xlu0 0
        %996 = vperm.xlu0 %995, %v789
        %v997 = vpop.permute.xlu0 %996
        %998 = vset.pattern.permute.xlu0 0
        %999 = vperm.xlu0 %998, %v838
        %v1000 = vpop.permute.xlu0 %999
        %1001 = vset.pattern.permute.xlu0 0
        %1002 = vperm.xlu0 %1001, %v887
        %v1003 = vpop.permute.xlu0 %1002
        %1004 = vset.pattern.permute.xlu0 0
        %1005 = vperm.xlu0 %1004, %v936
        %v1006 = vpop.permute.xlu0 %1005
        %1007 = vset.pattern.permute.xlu0 0
        %1008 = vperm.xlu0 %1007, %v985
        %v1009 = vpop.permute.xlu0 %1008
        %v1010 = vlaneseq
        %v1011 = vshrl.u32 %v1010, 7
        %v1012 = vsub.s32 %v282, %v1011
        %v1013 = vrot.slane %v988, %v1012
        %v1014 = vadd.s32 %v282, 4294967288
        %v1015 = vlaneseq
        %v1016 = vshrl.u32 %v1015, 7
        %v1017 = vsub.s32 %v1014, %v1016
        %v1018 = vrot.slane %v991, %v1017
        %vm1019 = vcmask 130112
        %v1020 = vsel %vm1019, %v1018, %v1013
        %v1021 = vadd.s32 %v282, 4294967280
        %v1022 = vlaneseq
        %v1023 = vshrl.u32 %v1022, 7
        %v1024 = vsub.s32 %v1021, %v1023
        %v1025 = vrot.slane %v994, %v1024
        %vm1026 = vcmask 195712
        %v1027 = vsel %vm1026, %v1025, %v1020
        %v1028 = vadd.s32 %v282, 4294967272
        %v1029 = vlaneseq
        %v1030 = vshrl.u32 %v1029, 7
        %v1031 = vsub.s32 %v1028, %v1030
        %v1032 = vrot.slane %v997, %v1031
        %vm1033 = vcmask 261312
        %v1034 = vsel %vm1033, %v1032, %v1027
        %v1035 = vadd.s32 %v282, 4294967264
        %v1036 = vlaneseq
        %v1037 = vshrl.u32 %v1036, 7
        %v1038 = vsub.s32 %v1035, %v1037
        %v1039 = vrot.slane %v1000, %v1038
        %vm1040 = vcmask 326912
        %v1041 = vsel %vm1040, %v1039, %v1034
        %v1042 = vadd.s32 %v282, 4294967256
        %v1043 = vlaneseq
        %v1044 = vshrl.u32 %v1043, 7
        %v1045 = vsub.s32 %v1042, %v1044
        %v1046 = vrot.slane %v1003, %v1045
        %vm1047 = vcmask 392512
        %v1048 = vsel %vm1047, %v1046, %v1041
        %v1049 = vadd.s32 %v282, 4294967248
        %v1050 = vlaneseq
        %v1051 = vshrl.u32 %v1050, 7
        %v1052 = vsub.s32 %v1049, %v1051
        %v1053 = vrot.slane %v1006, %v1052
        %vm1054 = vcmask 458112
        %v1055 = vsel %vm1054, %v1053, %v1048
        %v1056 = vadd.s32 %v282, 4294967240
        %v1057 = vlaneseq
        %v1058 = vshrl.u32 %v1057, 7
        %v1059 = vsub.s32 %v1056, %v1058
        %v1060 = vrot.slane %v1009, %v1059
        %vm1061 = vcmask 523712
        %v1062 = vsel %vm1061, %v1060, %v1055
        %v1064 = vunpack.c.l.s4 1966171168
        %v1065 = vunpack.c.0.s8 %v1064
        %v1066 = vlaneseq
        %v1067 = vshrl.u32 %v1066, 7
        %v1068 = vsub.s32 %v1065, %v1067
        %v1069 = vrot.slane %v1062, %v1068
        %v1071 = vunpack.c.l.s4 1966171168
        %v1072 = vunpack.c.0.s8 %v1071
        %v1073 = vlaneseq
        %v1074 = vshrl.u32 %v1073, 7
        %v1075 = vsub.s32 %v1072, %v1074
        %v1076 = vrot.slane %v1069, %v1075
        %v1078 = vadd.f32 %v305, %v1076
        %vm1079 = vcmask 516096
        %1080 = vst.msk [vmem:[#allocation2] sm:$0x1] %vm1079, %v1078
        // Predicated region
        $region49: #{tpu_custom_call.1} parent=39 // pred_check
          %p1081 = pneg %p259
        $region50: #{tpu_custom_call.1} parent=39 // pred_check_branch
          %1083 = sbr.rel (%p1081) target = $region52
        $region51: #{tpu_custom_call.1} parent=39 // pred_region
          %v1084 = vld [vmem:[#allocation2] sm:$0x1]
          %v1085 = vmul.f32 %v1084, 0.00390625
          %v1086 = vld [vmem:[%s1] sm:$0xff]
          %v1087 = vld [vmem:[%s1 + $0x8] sm:$0xff]
          %v1088 = vld [vmem:[%s1 + $0x10] sm:$0xff]
          %v1089 = vld [vmem:[%s1 + $0x18] sm:$0xff]
          %v1090 = vld [vmem:[%s1 + $0x20] sm:$0xff]
          %v1091 = vld [vmem:[%s1 + $0x28] sm:$0xff]
          %v1092 = vld [vmem:[%s1 + $0x30] sm:$0xff]
          %v1093 = vld [vmem:[%s1 + $0x38] sm:$0xff]
          %v1094 = vld [vmem:[%s2] sm:$0x1]
          %v1095 = vld [vmem:[%s3] sm:$0xf]
          %v1096 = vld [vmem:[%s4] sm:$0x1]
          %vm1097 = vcmask 523264
          %v1099 = vsel %vm1097, %v1085, 0
          %1101 = vmatprep.subr.mxu0 0.0
          %1102 = vmatpush1.msra.mxu0 %v1086
          %1103 = vmatprep.subr.mxu0 0.0
          %1104 = vmatpush1.msra.mxu0 %v1087
          %1105 = vmatprep.subr.mxu0 0.0
          %1106 = vmatpush1.msra.mxu0 %v1088
          %1107 = vmatprep.subr.mxu0 0.0
          %1108 = vmatpush1.msra.mxu0 %v1089
          %1109 = vmatprep.subr.mxu0 0.0
          %1110 = vmatpush1.msra.mxu0 %v1090
          %1111 = vmatprep.subr.mxu0 0.0
          %1112 = vmatpush1.msra.mxu0 %v1091
          %1113 = vmatprep.subr.mxu0 0.0
          %1114 = vmatpush1.msra.mxu0 %v1092
          %1115 = vmatprep.subr.mxu0 0.0
          %1116 = vmatpush1.msra.mxu0 %v1093
          %1117 = vmatprep.subr.mxu0 0.0
          %1118 = vmatpush1.msra.mxu0 0.0
          %1119 = vmatprep.subr.mxu0 0.0
          %1120 = vmatpush1.msra.mxu0 0.0
          %1121 = vmatprep.subr.mxu0 0.0
          %1122 = vmatpush1.msra.mxu0 0.0
          %1123 = vmatprep.subr.mxu0 0.0
          %1124 = vmatpush1.msra.mxu0 0.0
          %1125 = vmatprep.subr.mxu0 0.0
          %1126 = vmatpush1.msra.mxu0 0.0
          %1127 = vmatprep.subr.mxu0 0.0
          %1128 = vmatpush1.msra.mxu0 0.0
          %1129 = vmatprep.subr.mxu0 0.0
          %1130 = vmatpush1.msra.mxu0 0.0
          %1131 = vmatprep.subr.mxu0 0.0
          %1132 = vmatpush1.msra.mxu0 0.0
          %1133 = vmatprep.subr.mxu0 0.0
          %1134 = vmatpush1.msra.mxu0 0.0
          %1135 = vmatprep.subr.mxu0 0.0
          %1136 = vmatpush1.msra.mxu0 0.0
          %1137 = vmatprep.subr.mxu0 0.0
          %1138 = vmatpush1.msra.mxu0 0.0
          %1139 = vmatprep.subr.mxu0 0.0
          %1140 = vmatpush1.msra.mxu0 0.0
          %1141 = vmatprep.subr.mxu0 0.0
          %1142 = vmatpush1.msra.mxu0 0.0
          %1143 = vmatprep.subr.mxu0 0.0
          %1144 = vmatpush1.msra.mxu0 0.0
          %1145 = vmatprep.subr.mxu0 0.0
          %1146 = vmatpush1.msra.mxu0 0.0
          %1147 = vmatprep.subr.mxu0 0.0
          %1148 = vmatpush1.msra.mxu0 0.0
          %1149 = vmatprep.subr.mxu0 0.0
          %1150 = vmatpush1.msra.mxu0 0.0
          %1151 = vmatprep.subr.mxu0 0.0
          %1152 = vmatpush1.msra.mxu0 0.0
          %1153 = vmatprep.subr.mxu0 0.0
          %1154 = vmatpush1.msra.mxu0 0.0
          %1155 = vmatprep.subr.mxu0 0.0
          %1156 = vmatpush1.msra.mxu0 0.0
          %1157 = vmatprep.subr.mxu0 0.0
          %1158 = vmatpush1.msra.mxu0 0.0
          %1159 = vmatprep.subr.mxu0 0.0
          %1160 = vmatpush1.msra.mxu0 0.0
          %1161 = vmatprep.subr.mxu0 0.0
          %1162 = vmatpush1.msra.mxu0 0.0
          %1163 = vmatprep.subr.mxu0 0.0
          %1164 = vmatpush1.msra.mxu0 0.0
          %1165 = vmatprep.mubr.f32.mxu0 0.0
          %1166 = vmatmul.mubr.f32.gmra.mrb[0].mxu0 %v1099
          %v1167 = vpop.f32.mrb[0].mxu0
          %v1168 = vadd.f32 %v1094, %v1167
          %v1169 = vpop.f32.mrb[0].mxu0
          %1170 = vdwg.mxu0
          %v1171 = vmax.f32 %v1168, 0.0
          %vm1172 = vcmask 31744
          %v1174 = vsel %vm1172, %v1171, 0
          %vm1176 = vcmask 1043456
          %v1178 = vsel %vm1176, %v1095, 0
          %1180 = vmatprep.subr.mxu0 0.0
          %1181 = vmatpush1.msra.mxu0 %v1178
          %1182 = vmatprep.subr.mxu0 0.0
          %1183 = vmatpush1.msra.mxu0 0.0
          %1184 = vmatprep.subr.mxu0 0.0
          %1185 = vmatpush1.msra.mxu0 0.0
          %1186 = vmatprep.subr.mxu0 0.0
          %1187 = vmatpush1.msra.mxu0 0.0
          %1188 = vmatprep.subr.mxu0 0.0
          %1189 = vmatpush1.msra.mxu0 0.0
          %1190 = vmatprep.subr.mxu0 0.0
          %1191 = vmatpush1.msra.mxu0 0.0
          %1192 = vmatprep.subr.mxu0 0.0
          %1193 = vmatpush1.msra.mxu0 0.0
          %1194 = vmatprep.subr.mxu0 0.0
          %1195 = vmatpush1.msra.mxu0 0.0
          %1196 = vmatprep.subr.mxu0 0.0
          %1197 = vmatpush1.msra.mxu0 0.0
          %1198 = vmatprep.subr.mxu0 0.0
          %1199 = vmatpush1.msra.mxu0 0.0
          %1200 = vmatprep.subr.mxu0 0.0
          %1201 = vmatpush1.msra.mxu0 0.0
          %1202 = vmatprep.subr.mxu0 0.0
          %1203 = vmatpush1.msra.mxu0 0.0
          %1204 = vmatprep.subr.mxu0 0.0
          %1205 = vmatpush1.msra.mxu0 0.0
          %1206 = vmatprep.subr.mxu0 0.0
          %1207 = vmatpush1.msra.mxu0 0.0
          %1208 = vmatprep.subr.mxu0 0.0
          %1209 = vmatpush1.msra.mxu0 0.0
          %1210 = vmatprep.subr.mxu0 0.0
          %1211 = vmatpush1.msra.mxu0 0.0
          %1212 = vmatprep.subr.mxu0 0.0
          %1213 = vmatpush1.msra.mxu0 0.0
          %1214 = vmatprep.subr.mxu0 0.0
          %1215 = vmatpush1.msra.mxu0 0.0
          %1216 = vmatprep.subr.mxu0 0.0
          %1217 = vmatpush1.msra.mxu0 0.0
          %1218 = vmatprep.subr.mxu0 0.0
          %1219 = vmatpush1.msra.mxu0 0.0
          %1220 = vmatprep.subr.mxu0 0.0
          %1221 = vmatpush1.msra.mxu0 0.0
          %1222 = vmatprep.subr.mxu0 0.0
          %1223 = vmatpush1.msra.mxu0 0.0
          %1224 = vmatprep.subr.mxu0 0.0
          %1225 = vmatpush1.msra.mxu0 0.0
          %1226 = vmatprep.subr.mxu0 0.0
          %1227 = vmatpush1.msra.mxu0 0.0
          %1228 = vmatprep.subr.mxu0 0.0
          %1229 = vmatpush1.msra.mxu0 0.0
          %1230 = vmatprep.subr.mxu0 0.0
          %1231 = vmatpush1.msra.mxu0 0.0
          %1232 = vmatprep.subr.mxu0 0.0
          %1233 = vmatpush1.msra.mxu0 0.0
          %1234 = vmatprep.subr.mxu0 0.0
          %1235 = vmatpush1.msra.mxu0 0.0
          %1236 = vmatprep.subr.mxu0 0.0
          %1237 = vmatpush1.msra.mxu0 0.0
          %1238 = vmatprep.subr.mxu0 0.0
          %1239 = vmatpush1.msra.mxu0 0.0
          %1240 = vmatprep.subr.mxu0 0.0
          %1241 = vmatpush1.msra.mxu0 0.0
          %1242 = vmatprep.subr.mxu0 0.0
          %1243 = vmatpush1.msra.mxu0 0.0
          %1244 = vmatprep.mubr.f32.mxu0 0.0
          %1245 = vmatmul.mubr.f32.gmra.mrb[0].mxu0 %v1174
          %v1246 = vpop.f32.mrb[0].mxu0
          %v1247 = vadd.f32 %v1096, %v1246
          %v1248 = vpop.f32.mrb[0].mxu0
          %1249 = vdwg.mxu0
          %v1250 = vsub.f32 0.0, %v1247
          %v1251 = vmul.f32 %v1250, 1.442695
          %v1252 = vpow.pop %v1251
          %v1253 = vadd.f32 %v1252, 1.0
          %v1254 = vrcp.pop %v1253
          %v1255 = vmul.f32 1.0, %v1254
          %1256 = vst.msk [vmem:[%s257] sm:$0x1] %vm1079, %v1255
        $region52: #{tpu_custom_call.1} parent=39 // pred_fallthru
          _
        %s1257 = sand.u32 %s154, 1
        %s1258 = scalar_lea.sflag [#allocation5], %s1257
        %s1259 = sand.u32 %s154, 1
        %s1260 = scalar_lea.vmem [#allocation6], %s1259
        // Predicated region
        $region53: #{tpu_custom_call.1} parent=39 // pred_check
          %p1261 = pneg %p164
        $region54: #{tpu_custom_call.1} parent=39 // pred_check_branch
          %1263 = sbr.rel (%p1261) target = $region56
        $region55: #{tpu_custom_call.1} parent=39 // pred_region
          %s1265 = ssub.s32 16, 16
          %1266 = vsyncadd %s1258, %s1265
          %s1267 = smul.addr %s26, 16
          %s1268 = scalar_lea.hbm %s5, %s1267
          %s1270 = sshll.u32 %s1260, 4
          %s1271 = int_to_ptr.vmem [resolvable:$true] %s1270
          %1273 = dma.vmem_to_hbm [thread:$0]  %s1271, 16, %s1268, %s1258
        $region56: #{tpu_custom_call.1} parent=39 // pred_fallthru
          _
      $region40: #{tpu_custom_call.1} parent=5 // pred_fallthru
        _
      %p1274 = scmp.le.s32.totalorder 2, %s17
      // Predicated region
      $region57: #{tpu_custom_call.1} parent=5 // pred_check
        %p1275 = pneg %p1274
      $region58: #{tpu_custom_call.1} parent=5 // pred_check_branch
        %1277 = sbr.rel (%p1275) target = $region60
      $region59: #{tpu_custom_call.1} parent=5 // pred_region
        %s1278 = ssub.s32 %s17, 2
        // Predicated region
        $region61: #{tpu_custom_call.1} parent=59 // pred_check
          %p1279 = pneg %p170
        $region62: #{tpu_custom_call.1} parent=59 // pred_check_branch
          %1281 = sbr.rel (%p1279) target = $region64
        $region63: #{tpu_custom_call.1} parent=59 // pred_region
          %s1282 = sand.u32 %s155, 1
          %s1283 = scalar_lea.sflag [#allocation5], %s1282
          %s1284 = sand.u32 %s155, 1
          %s1285 = scalar_lea.vmem [#allocation6], %s1284
          %1286 = dma.done %s1283, 16
        $region64: #{tpu_custom_call.1} parent=59 // pred_fallthru
          _
      $region60: #{tpu_custom_call.1} parent=5 // pred_fallthru
        _
    $region6: #{tpu_custom_call.1} parent=1 // loop_footer
      %s21 = sadd.s32 1, %s17
    $region7: #{tpu_custom_call.1} parent=1 // loop_footer_branch
      %16 = sbr.rel target = $region3
    $region8: #{tpu_custom_call.1} parent=1 // loop_exit
      _
    %1287 = vsyncpa [#allocation4], 1
    %s1288 = scalar_lea.sflag [#allocation4], 1
    %1289 = vsyncpa %s1288, 1
    %1290 = vsyncpa [#allocation5], 1
    %s1291 = scalar_lea.sflag [#allocation5], 1
    %1292 = vsyncpa %s1291, 1

</llo_original>
